<compile_context>
chip_gen: v5e
topology: v5e:2x2
jax: 0.10.0
libtpu: 0.0.40
codegen_flags: <defaults>
</compile_context>

<pallas_src>
import jax
import jax.numpy as jnp
from jax.experimental import pallas as pl
from jax.experimental.pallas import tpu as pltpu


def _bn_relu_conv1x1_kernel(x_ref, s1_ref, b1_ref, w1_ref, y_ref, psum_ref, psqr_ref):
    # x_ref:   (1, Cin, T)     one image, one spatial tile (spatial on lanes)
    # s1,b1:   (Cin, 1)        folded BN1 scale / shift (broadcast along lanes)
    # w1_ref:  (Cout1, Cin)    1x1 conv weight
    # y_ref:   (1, Cout1, T)   conv1 output tile
    # psum/psqr: (1, 1, Cout1, 1)  per-(image,tile) partial sums for BN2 statistics
    z = jnp.maximum(x_ref[0] * s1_ref[...] + b1_ref[...], 0.0)          # BN1 + ReLU
    y = jnp.dot(w1_ref[...], z, preferred_element_type=jnp.float32)     # 1x1 conv (MXU)
    y_ref[0] = y.astype(y_ref.dtype)
    psum_ref[0, 0] = jnp.sum(y, axis=1, keepdims=True)                  # (Cout1, 1)
    psqr_ref[0, 0] = jnp.sum(y * y, axis=1, keepdims=True)              # (Cout1, 1)


def _make_bn_relu_conv3x3_kernel(H, W, G, Cout1):
    HW = H * W

    def kernel(y_ref, s2_ref, b2_ref, w2_ref, m_ref, o_ref):
        # y_ref:  (1, Cout1, HW)   conv1 output for one image (spatial on lanes)
        # s2,b2:  (Cout1, 1)       folded BN2 scale / shift
        # w2_ref: (9, G, Cout1)    3x3 conv weight, one (G, Cout1) matrix per tap
        # m_ref:  (9, 1, HW)       0/1 boundary masks per tap (zero padding semantics)
        # o_ref:  (1, G, HW)
        t = jnp.maximum(y_ref[0] * s2_ref[...] + b2_ref[...], 0.0)      # BN2 + ReLU
        acc = jnp.zeros((G, HW), jnp.float32)
        for tap in range(9):                                            # static unroll
            oh = tap // 3 - 1
            ow = tap % 3 - 1
            s = oh * W + ow                                             # flat shift
            if s == 0:
                src = t
            else:
                # src[:, p] = t[:, p + s] (lane rotation), zeroed where the 3x3 window
                # falls outside the image (zero padding).
                src = pltpu.roll(t, (-s) % HW, axis=1) * m_ref[tap]
            acc = acc + jnp.dot(w2_ref[tap], src,
                                preferred_element_type=jnp.float32)
        o_ref[0] = acc.astype(o_ref.dtype)

    return kernel


def bottleneck_forward(x, gamma1, beta1, conv1_w, gamma2, beta2, conv2_w, eps=1e-5):
    N, Cin, H, W = x.shape
    Cout1 = conv1_w.shape[0]           # 4 * growth_rate
    G = conv2_w.shape[0]               # growth_rate
    HW = H * W
    dtype = x.dtype

    # ---- BN1 training-mode batch stats (biased variance), folded (JAX glue) ----
    mean1 = jnp.mean(x, axis=(0, 2, 3))
    var1 = jnp.var(x, axis=(0, 2, 3))
    scale1 = gamma1 / jnp.sqrt(var1 + eps)
    shift1 = beta1 - mean1 * scale1

    x_flat = x.reshape(N, Cin, HW)                       # native NCHW, no transpose
    w1 = conv1_w.reshape(Cout1, Cin).astype(dtype)

    # spatial tile: biggest lane-dense tile that divides HW
    T = HW
    if HW % 128 == 0:
        for cand in (2048, 1024, 512, 256, 128):
            if HW % cand == 0:
                T = cand
                break
    Tt = HW // T

    # ---- kernel 1: BN1 + ReLU + 1x1 conv, plus partial sums for BN2 stats ----
    y, psum, psqr = pl.pallas_call(
        _bn_relu_conv1x1_kernel,
        out_shape=(
            jax.ShapeDtypeStruct((N, Cout1, HW), dtype),
            jax.ShapeDtypeStruct((N, Tt, Cout1, 1), jnp.float32),
            jax.ShapeDtypeStruct((N, Tt, Cout1, 1), jnp.float32),
        ),
        grid_spec=pltpu.PrefetchScalarGridSpec(
            num_scalar_prefetch=0,
            grid=(N, Tt),
            in_specs=[
                pl.BlockSpec((1, Cin, T), lambda n, t: (n, 0, t)),
                pl.BlockSpec((Cin, 1), lambda n, t: (0, 0)),
                pl.BlockSpec((Cin, 1), lambda n, t: (0, 0)),
                pl.BlockSpec((Cout1, Cin), lambda n, t: (0, 0)),
            ],
            out_specs=[
                pl.BlockSpec((1, Cout1, T), lambda n, t: (n, 0, t)),
                pl.BlockSpec((1, 1, Cout1, 1), lambda n, t: (n, t, 0, 0)),
                pl.BlockSpec((1, 1, Cout1, 1), lambda n, t: (n, t, 0, 0)),
            ],
        ),
        compiler_params=pltpu.CompilerParams(
            dimension_semantics=("parallel", "parallel")),
    )(x_flat,
      scale1.reshape(Cin, 1).astype(dtype),
      shift1.reshape(Cin, 1).astype(dtype),
      w1)

    # ---- BN2 training-mode stats from the fused partial sums (tiny glue) ----
    cnt = N * HW
    sum_y = jnp.sum(psum, axis=(0, 1))[:, 0]
    sum_y2 = jnp.sum(psqr, axis=(0, 1))[:, 0]
    mean2 = sum_y / cnt
    var2 = jnp.maximum(sum_y2 / cnt - mean2 * mean2, 0.0)   # biased (training-mode) var
    scale2 = gamma2 / jnp.sqrt(var2 + eps)
    shift2 = beta2 - mean2 * scale2

    # 3x3 weight as one (G, Cout1) matrix per tap, tap = (kh)*3 + (kw)
    w2_taps = jnp.transpose(conv2_w, (2, 3, 0, 1)).reshape(9, G, Cout1).astype(dtype)

    # Precomputed per-tap 0/1 boundary masks (zero-padding semantics), tiny constants.
    hh = jnp.arange(H)
    ww = jnp.arange(W)
    masks = []
    for kh in range(3):
        for kw in range(3):
            oh, ow = kh - 1, kw - 1
            mh = (hh + oh >= 0) & (hh + oh < H)
            mw = (ww + ow >= 0) & (ww + ow < W)
            masks.append((mh[:, None] & mw[None, :]).reshape(HW))
    tap_masks = jnp.stack(masks).astype(dtype).reshape(9, 1, HW)

    # ---- kernel 2: BN2 + ReLU + 3x3 conv (9 shifted MXU matmuls) ----
    conv3_kernel = _make_bn_relu_conv3x3_kernel(H, W, G, Cout1)
    out_flat = pl.pallas_call(
        conv3_kernel,
        out_shape=jax.ShapeDtypeStruct((N, G, HW), dtype),
        grid_spec=pltpu.PrefetchScalarGridSpec(
            num_scalar_prefetch=0,
            grid=(N,),
            in_specs=[
                pl.BlockSpec((1, Cout1, HW), lambda n: (n, 0, 0)),
                pl.BlockSpec((Cout1, 1), lambda n: (0, 0)),
                pl.BlockSpec((Cout1, 1), lambda n: (0, 0)),
                pl.BlockSpec((9, G, Cout1), lambda n: (0, 0, 0)),
                pl.BlockSpec((9, 1, HW), lambda n: (0, 0, 0)),
            ],
            out_specs=pl.BlockSpec((1, G, HW), lambda n: (n, 0, 0)),
        ),
        compiler_params=pltpu.CompilerParams(dimension_semantics=("parallel",)),
    )(y,
      scale2.reshape(Cout1, 1).astype(dtype),
      shift2.reshape(Cout1, 1).astype(dtype),
      w2_taps, tap_masks)

    out = out_flat.reshape(N, G, H, W)                      # already NCHW
    return jnp.concatenate([x, out], axis=1)                # torch.cat([x, out], dim=1)


def bottleneck_reference(x, gamma1, beta1, conv1_w, gamma2, beta2, conv2_w, eps=1e-5):
    """Plain-JAX reference mirroring the PyTorch training-mode forward."""
    def bn(v, g, b):
        m = jnp.mean(v, axis=(0, 2, 3), keepdims=True)
        va = jnp.var(v, axis=(0, 2, 3), keepdims=True)
        return (v - m) / jnp.sqrt(va + eps) * g[None, :, None, None] + b[None, :, None, None]

    z = jnp.maximum(bn(x, gamma1, beta1), 0.0)
    dn1 = jax.lax.conv_dimension_numbers(z.shape, conv1_w.shape, ('NCHW', 'OIHW', 'NCHW'))
    y = jax.lax.conv_general_dilated(z, conv1_w, (1, 1), 'VALID',
                                     dimension_numbers=dn1,
                                     precision=jax.lax.Precision.HIGHEST)
    t = jnp.maximum(bn(y, gamma2, beta2), 0.0)
    dn2 = jax.lax.conv_dimension_numbers(t.shape, conv2_w.shape, ('NCHW', 'OIHW', 'NCHW'))
    out = jax.lax.conv_general_dilated(t, conv2_w, (1, 1), ((1, 1), (1, 1)),
                                       dimension_numbers=dn2,
                                       precision=jax.lax.Precision.HIGHEST)
    return jnp.concatenate([x, out], axis=1)


if __name__ == "__main__":
    inplanes, growth_rate = 4, 2
    outplanes = growth_rate * 4
    N, H, W = 2, 16, 16

    key = jax.random.PRNGKey(0)
    kx, kg1, kb1, kw1, kg2, kb2, kw2 = jax.random.split(key, 7)
    x = jax.random.normal(kx, (N, inplanes, H, W), jnp.float32)          # NCHW, like PyTorch
    gamma1 = 1.0 + 0.1 * jax.random.normal(kg1, (inplanes,), jnp.float32)
    beta1 = 0.1 * jax.random.normal(kb1, (inplanes,), jnp.float32)
    conv1_w = 0.1 * jax.random.normal(kw1, (outplanes, inplanes, 1, 1), jnp.float32)
    gamma2 = 1.0 + 0.1 * jax.random.normal(kg2, (outplanes,), jnp.float32)
    beta2 = 0.1 * jax.random.normal(kb2, (outplanes,), jnp.float32)
    conv2_w = 0.1 * jax.random.normal(kw2, (growth_rate, outplanes, 3, 3), jnp.float32)

    out = bottleneck_forward(x, gamma1, beta1, conv1_w, gamma2, beta2, conv2_w)
    out = jax.block_until_ready(out)

    ref = bottleneck_reference(x, gamma1, beta1, conv1_w, gamma2, beta2, conv2_w)
    assert out.shape == (N, inplanes + growth_rate, H, W), out.shape
    max_err = float(jnp.max(jnp.abs(out - ref)))
    assert jnp.allclose(out, ref, atol=1e-4, rtol=1e-4), max_err

    print("KERNEL_OK")
</pallas_src>

<mosaic_0001>
module attributes {stable_mosaic.version = 11 : i64} {
  func.func @_bn_relu_conv1x1_kernel(%arg0: i32, %arg1: i32, %arg2: memref<1x4x256xf32, #tpu.memory_space<vmem>>, %arg3: memref<4x1xf32, #tpu.memory_space<vmem>>, %arg4: memref<4x1xf32, #tpu.memory_space<vmem>>, %arg5: memref<8x4xf32, #tpu.memory_space<vmem>>, %arg6: memref<1x8x256xf32, #tpu.memory_space<vmem>>, %arg7: memref<1x1x8x1xf32, #tpu.memory_space<vmem>>, %arg8: memref<1x1x8x1xf32, #tpu.memory_space<vmem>>) attributes {dimension_semantics = [#tpu.dimension_semantics<parallel>, #tpu.dimension_semantics<parallel>], iteration_bounds = array<i64: 2, 1>, scalar_prefetch = 0 : i64, scratch_operands = 0 : i64, tpu.core_type = #tpu.core_type<tc>, window_params = [{transform_indices = @transform_0, window_bounds = array<i64: 1, 4, 256>}, {pipeline_mode = #tpu.pipeline_mode<synchronous>, transform_indices = @transform_1, window_bounds = array<i64: 4, 1>}, {pipeline_mode = #tpu.pipeline_mode<synchronous>, transform_indices = @transform_2, window_bounds = array<i64: 4, 1>}, {pipeline_mode = #tpu.pipeline_mode<synchronous>, transform_indices = @transform_3, window_bounds = array<i64: 8, 4>}, {transform_indices = @transform_4, window_bounds = array<i64: 1, 8, 256>}, {transform_indices = @transform_5, window_bounds = array<i64: 1, 1, 8, 1>}, {transform_indices = @transform_6, window_bounds = array<i64: 1, 1, 8, 1>}]} {
    %c0 = arith.constant 0 : index
    %c0_0 = arith.constant 0 : index
    %c0_1 = arith.constant 0 : index
    %0 = vector.load %arg2[%c0, %c0_0, %c0_1] : memref<1x4x256xf32, #tpu.memory_space<vmem>>, vector<1x4x256xf32>
    %1 = vector.shape_cast %0 : vector<1x4x256xf32> to vector<4x256xf32>
    %c0_2 = arith.constant 0 : index
    %c0_3 = arith.constant 0 : index
    %2 = vector.load %arg3[%c0_2, %c0_3] : memref<4x1xf32, #tpu.memory_space<vmem>>, vector<4x1xf32>
    %3 = vector.broadcast %2 : vector<4x1xf32> to vector<4x256xf32>
    %4 = arith.mulf %1, %3 : vector<4x256xf32>
    %c0_4 = arith.constant 0 : index
    %c0_5 = arith.constant 0 : index
    %5 = vector.load %arg4[%c0_4, %c0_5] : memref<4x1xf32, #tpu.memory_space<vmem>>, vector<4x1xf32>
    %6 = vector.broadcast %5 : vector<4x1xf32> to vector<4x256xf32>
    %7 = arith.addf %4, %6 : vector<4x256xf32>
    %cst = arith.constant 0.000000e+00 : f32
    %8 = vector.broadcast %cst : f32 to vector<4x256xf32>
    %9 = arith.maximumf %7, %8 : vector<4x256xf32>
    %c0_6 = arith.constant 0 : index
    %c0_7 = arith.constant 0 : index
    %10 = vector.load %arg5[%c0_6, %c0_7] : memref<8x4xf32, #tpu.memory_space<vmem>>, vector<8x4xf32>
    %cst_8 = arith.constant dense<0.000000e+00> : vector<8x256xf32>
    %11 = tpu.matmul %10, %9, %cst_8 {dimension_numbers = #tpu.dot_dimension_numbers<[1], [0], [0], [1], [0, 0, 1, 1], [], []>} : vector<8x4xf32>, vector<4x256xf32>, vector<8x256xf32> -> vector<8x256xf32>
    %c0_9 = arith.constant 0 : index
    %c0_10 = arith.constant 0 : index
    %c0_11 = arith.constant 0 : index
    %12 = vector.load %arg6[%c0_9, %c0_10, %c0_11] : memref<1x8x256xf32, #tpu.memory_space<vmem>>, vector<1x8x256xf32>
    %13 = vector.shape_cast %12 : vector<1x8x256xf32> to vector<8x256xf32>
    %14 = vector.shape_cast %11 : vector<8x256xf32> to vector<1x8x256xf32>
    tpu.vector_store %arg6[%c0_9, %c0_10, %c0_11], %14 {strides = array<i32>} : memref<1x8x256xf32, #tpu.memory_space<vmem>>, vector<1x8x256xf32>,
    %cst_12 = arith.constant dense<0.000000e+00> : vector<8xf32>
    %15 = vector.multi_reduction <add>, %11, %cst_12 [1] : vector<8x256xf32> to vector<8xf32>
    %16 = vector.shape_cast %15 : vector<8xf32> to vector<8x1xf32>
    %c0_13 = arith.constant 0 : index
    %c0_14 = arith.constant 0 : index
    %c0_15 = arith.constant 0 : index
    %c0_16 = arith.constant 0 : index
    %17 = vector.load %arg7[%c0_13, %c0_14, %c0_15, %c0_16] : memref<1x1x8x1xf32, #tpu.memory_space<vmem>>, vector<1x1x8x1xf32>
    %18 = vector.shape_cast %17 : vector<1x1x8x1xf32> to vector<8x1xf32>
    %19 = vector.shape_cast %16 : vector<8x1xf32> to vector<1x1x8x1xf32>
    tpu.vector_store %arg7[%c0_13, %c0_14, %c0_15, %c0_16], %19 {strides = array<i32>} : memref<1x1x8x1xf32, #tpu.memory_space<vmem>>, vector<1x1x8x1xf32>,
    %20 = arith.mulf %11, %11 : vector<8x256xf32>
    %cst_17 = arith.constant dense<0.000000e+00> : vector<8xf32>
    %21 = vector.multi_reduction <add>, %20, %cst_17 [1] : vector<8x256xf32> to vector<8xf32>
    %22 = vector.shape_cast %21 : vector<8xf32> to vector<8x1xf32>
    %c0_18 = arith.constant 0 : index
    %c0_19 = arith.constant 0 : index
    %c0_20 = arith.constant 0 : index
    %c0_21 = arith.constant 0 : index
    %23 = vector.load %arg8[%c0_18, %c0_19, %c0_20, %c0_21] : memref<1x1x8x1xf32, #tpu.memory_space<vmem>>, vector<1x1x8x1xf32>
    %24 = vector.shape_cast %23 : vector<1x1x8x1xf32> to vector<8x1xf32>
    %25 = vector.shape_cast %22 : vector<8x1xf32> to vector<1x1x8x1xf32>
    tpu.vector_store %arg8[%c0_18, %c0_19, %c0_20, %c0_21], %25 {strides = array<i32>} : memref<1x1x8x1xf32, #tpu.memory_space<vmem>>, vector<1x1x8x1xf32>,
    return
  }
  func.func @transform_0(%arg0: i32, %arg1: i32) -> (i32, i32, i32) {
    %c0_i32 = arith.constant 0 : i32
    %c0_i32_0 = arith.constant 0 : i32
    return %arg0, %c0_i32, %arg1 : i32, i32, i32
  }
  func.func @transform_1(%arg0: i32, %arg1: i32) -> (i32, i32) {
    %c0_i32 = arith.constant 0 : i32
    %c0_i32_0 = arith.constant 0 : i32
    %c0_i32_1 = arith.constant 0 : i32
    return %c0_i32, %c0_i32_0 : i32, i32
  }
  func.func @transform_2(%arg0: i32, %arg1: i32) -> (i32, i32) {
    %c0_i32 = arith.constant 0 : i32
    %c0_i32_0 = arith.constant 0 : i32
    %c0_i32_1 = arith.constant 0 : i32
    return %c0_i32, %c0_i32_0 : i32, i32
  }
  func.func @transform_3(%arg0: i32, %arg1: i32) -> (i32, i32) {
    %c0_i32 = arith.constant 0 : i32
    %c0_i32_0 = arith.constant 0 : i32
    %c0_i32_1 = arith.constant 0 : i32
    return %c0_i32, %c0_i32_0 : i32, i32
  }
  func.func @transform_4(%arg0: i32, %arg1: i32) -> (i32, i32, i32) {
    %c0_i32 = arith.constant 0 : i32
    %c0_i32_0 = arith.constant 0 : i32
    return %arg0, %c0_i32, %arg1 : i32, i32, i32
  }
  func.func @transform_5(%arg0: i32, %arg1: i32) -> (i32, i32, i32, i32) {
    %c0_i32 = arith.constant 0 : i32
    %c0_i32_0 = arith.constant 0 : i32
    %c0_i32_1 = arith.constant 0 : i32
    return %arg0, %arg1, %c0_i32, %c0_i32_0 : i32, i32, i32, i32
  }
  func.func @transform_6(%arg0: i32, %arg1: i32) -> (i32, i32, i32, i32) {
    %c0_i32 = arith.constant 0 : i32
    %c0_i32_0 = arith.constant 0 : i32
    %c0_i32_1 = arith.constant 0 : i32
    return %arg0, %arg1, %c0_i32, %c0_i32_0 : i32, i32, i32, i32
  }
}

</mosaic_0001>

<llo_original>
// kernel: tpu_custom_call.1
$region0: #{tpu_custom_call.1}
  #allocation0 [shape = 'u32[]', space=smem, size = 0x4, offset = 0x4, fixed_abs, tag = 'smem constant byte address 0x4 - core index']
  #allocation1 [shape = 'u32[72,128]{1,0:T(1,128)}', space=vmem, size = 0x9000, scoped, tag = 'internal scratch']
  %s0 = inlined_call_operand.vmem [shape: f32[2,4,256], index: 0, kind: input, shape index: {}]
  %s1 = inlined_call_operand.vmem [shape: f32[4,1], index: 1, kind: input, shape index: {}]
  %s2 = inlined_call_operand.vmem [shape: f32[4,1], index: 2, kind: input, shape index: {}]
  %s3 = inlined_call_operand.vmem [shape: f32[8,4], index: 3, kind: input, shape index: {}]
  %s4 = inlined_call_operand.hbm [shape: f32[2,8,256], index: 4, kind: output, shape index: {0}]
  %s5 = inlined_call_operand.vmem [shape: f32[2,1,8,1], index: 5, kind: output, shape index: {1}]
  %s6 = inlined_call_operand.vmem [shape: f32[2,1,8,1], index: 6, kind: output, shape index: {2}]
  %7 = xla_tuple %s4, %s5, %s6
  %s8 = sld [smem:[#allocation0]]
  $region65: #{tpu_custom_call.1} parent=0
    _
  %s10 = ssub.s32 1, %s8
  %s11 = scalar_select 0, %s10, %s8
  $region1: #{tpu_custom_call.1} parent=0
    #allocation2 [shape = 'u8[16384]{0}', space=vmem, size = 0x4000, scoped, tag = 'output window, operand 0']
    #allocation3 [shape = 's32[2]{0}', space=sflag, size = 0x8, scoped, tag = 'scoped memory for tpu_custom_call.1']
    %12 = vsyncpa [#allocation3], 0
    %s13 = scalar_lea.sflag [#allocation3], 1
    %14 = vsyncpa %s13, 0
    loop: start=0, step=1, limit=4
    $region2: #{tpu_custom_call.1} parent=1 // loop_pre_header
      _
    $region3: #{tpu_custom_call.1} parent=1 // loop_header
      %s16 = sphi 0, %s20
      %p17 = scmp.ge.s32.totalorder %s16, 4
      %s23 = sphi 0, %s35
      %s24 = sphi 0, %s31
      %s25 = sphi 0, %s23
      %s26 = sphi 0, %s24
      %s27 = sphi 0, %s25
      %s28 = sphi 0, %s26
      %s40 = sphi 0, %s42
      %s43 = sphi 0, %s40
      %s44 = sphi 0, %s43
      %s60 = sphi 0, %s44
      %s64 = sphi 0, %s64
      %s66 = sphi 0, %s64
      %s67 = sphi 0, %s66
      %s81 = sphi 0, %s67
      %s85 = sphi 0, %s85
      %s87 = sphi 0, %s85
      %s88 = sphi 0, %s87
      %s102 = sphi 0, %s88
      %s106 = sphi 0, %s106
      %s108 = sphi 0, %s106
      %s109 = sphi 0, %s108
      %s123 = sphi 0, %s109
      %s131 = sphi 0, %s133
      %s134 = sphi 0, %s131
      %s135 = sphi 0, %s134
      %s151 = sphi 0, %s135
      %s159 = sphi 0, %s161
      %s162 = sphi 0, %s159
      %s163 = sphi 0, %s162
      %s179 = sphi 0, %s163
      %s187 = sphi 0, %s189
      %s190 = sphi 0, %s187
      %s191 = sphi 0, %s190
      %s207 = sphi 0, %s191
    $region4: #{tpu_custom_call.1} parent=1 // loop_header_branch
      %19 = sbr.rel (%p17) target = $region8
    $region5: #{tpu_custom_call.1} parent=1 // loop_body
      %s21 = ssub.s32 %s16, 1
      %s22 = ssub.s32 %s16, 2
      %s29 = sadd.s32 1, %s24
      %p30 = scmp.ge.s32.totalorder %s29, 1
      %s31 = scalar_select %p30, 0, %s29
      %s32 = sadd.s32 1, %s23
      %s33 = scalar_select %p30, %s32, %s23
      %p34 = scmp.ge.s32.totalorder %s33, 2
      %s35 = scalar_select %p34, 0, %s33
      %s36 = ssub.s32 %s23, %s35
      %s37 = ssub.s32 %s24, %s31
      %s38 = sor.u32 %s36, %s37
      %p39 = scmp.eq.s32.totalorder %s38, 0
      %s41 = sadd.s32 %s40, 1
      %s42 = scalar_select %p39, %s40, %s41
      %p45 = pneg %p39
      %p46 = scmp.eq.s32.totalorder %s16, 1
      %p47 = por %p45, %p46
      %p48 = scmp.ne.s32.totalorder %s40, %s43
      %p49 = scmp.eq.s32.totalorder %s16, 0
      %p50 = por %p48, %p49
      %p51 = scmp.ne.s32.totalorder %s40, %s43
      %p52 = scmp.eq.s32.totalorder %s21, 1
      %p53 = por %p51, %p52
      %p54 = scmp.ne.s32.totalorder %s43, %s44
      %p55 = scmp.eq.s32.totalorder %s21, 0
      %p56 = por %p54, %p55
      %p57 = scmp.ne.s32.totalorder %s43, %s44
      %p58 = scmp.eq.s32.totalorder %s22, 1
      %p59 = por %p57, %p58
      %p61 = scmp.ne.s32.totalorder %s44, %s60
      %p62 = scmp.eq.s32.totalorder %s22, 0
      %p63 = por %p61, %p62
      %s65 = sadd.s32 %s64, 1
      %p68 = scmp.eq.s32.totalorder %s16, 1
      %p69 = scmp.ne.s32.totalorder %s64, %s66
      %p70 = scmp.eq.s32.totalorder %s16, 0
      %p71 = por %p69, %p70
      %p72 = scmp.ne.s32.totalorder %s64, %s66
      %p73 = scmp.eq.s32.totalorder %s21, 1
      %p74 = por %p72, %p73
      %p75 = scmp.ne.s32.totalorder %s66, %s67
      %p76 = scmp.eq.s32.totalorder %s21, 0
      %p77 = por %p75, %p76
      %p78 = scmp.ne.s32.totalorder %s66, %s67
      %p79 = scmp.eq.s32.totalorder %s22, 1
      %p80 = por %p78, %p79
      %p82 = scmp.ne.s32.totalorder %s67, %s81
      %p83 = scmp.eq.s32.totalorder %s22, 0
      %p84 = por %p82, %p83
      %s86 = sadd.s32 %s85, 1
      %p89 = scmp.eq.s32.totalorder %s16, 1
      %p90 = scmp.ne.s32.totalorder %s85, %s87
      %p91 = scmp.eq.s32.totalorder %s16, 0
      %p92 = por %p90, %p91
      %p93 = scmp.ne.s32.totalorder %s85, %s87
      %p94 = scmp.eq.s32.totalorder %s21, 1
      %p95 = por %p93, %p94
      %p96 = scmp.ne.s32.totalorder %s87, %s88
      %p97 = scmp.eq.s32.totalorder %s21, 0
      %p98 = por %p96, %p97
      %p99 = scmp.ne.s32.totalorder %s87, %s88
      %p100 = scmp.eq.s32.totalorder %s22, 1
      %p101 = por %p99, %p100
      %p103 = scmp.ne.s32.totalorder %s88, %s102
      %p104 = scmp.eq.s32.totalorder %s22, 0
      %p105 = por %p103, %p104
      %s107 = sadd.s32 %s106, 1
      %p110 = scmp.eq.s32.totalorder %s16, 1
      %p111 = scmp.ne.s32.totalorder %s106, %s108
      %p112 = scmp.eq.s32.totalorder %s16, 0
      %p113 = por %p111, %p112
      %p114 = scmp.ne.s32.totalorder %s106, %s108
      %p115 = scmp.eq.s32.totalorder %s21, 1
      %p116 = por %p114, %p115
      %p117 = scmp.ne.s32.totalorder %s108, %s109
      %p118 = scmp.eq.s32.totalorder %s21, 0
      %p119 = por %p117, %p118
      %p120 = scmp.ne.s32.totalorder %s108, %s109
      %p121 = scmp.eq.s32.totalorder %s22, 1
      %p122 = por %p120, %p121
      %p124 = scmp.ne.s32.totalorder %s109, %s123
      %p125 = scmp.eq.s32.totalorder %s22, 0
      %p126 = por %p124, %p125
      %s127 = ssub.s32 %s23, %s35
      %s128 = ssub.s32 %s24, %s31
      %s129 = sor.u32 %s127, %s128
      %p130 = scmp.eq.s32.totalorder %s129, 0
      %s132 = sadd.s32 %s131, 1
      %s133 = scalar_select %p130, %s131, %s132
      %p136 = pneg %p130
      %p137 = scmp.eq.s32.totalorder %s16, 1
      %p138 = por %p136, %p137
      %p139 = scmp.ne.s32.totalorder %s131, %s134
      %p140 = scmp.eq.s32.totalorder %s16, 0
      %p141 = por %p139, %p140
      %p142 = scmp.ne.s32.totalorder %s131, %s134
      %p143 = scmp.eq.s32.totalorder %s21, 1
      %p144 = por %p142, %p143
      %p145 = scmp.ne.s32.totalorder %s134, %s135
      %p146 = scmp.eq.s32.totalorder %s21, 0
      %p147 = por %p145, %p146
      %p148 = scmp.ne.s32.totalorder %s134, %s135
      %p149 = scmp.eq.s32.totalorder %s22, 1
      %p150 = por %p148, %p149
      %p152 = scmp.ne.s32.totalorder %s135, %s151
      %p153 = scmp.eq.s32.totalorder %s22, 0
      %p154 = por %p152, %p153
      %s155 = ssub.s32 %s23, %s35
      %s156 = ssub.s32 %s24, %s31
      %s157 = sor.u32 %s155, %s156
      %p158 = scmp.eq.s32.totalorder %s157, 0
      %s160 = sadd.s32 %s159, 1
      %s161 = scalar_select %p158, %s159, %s160
      %p164 = pneg %p158
      %p165 = scmp.eq.s32.totalorder %s16, 1
      %p166 = por %p164, %p165
      %p167 = scmp.ne.s32.totalorder %s159, %s162
      %p168 = scmp.eq.s32.totalorder %s16, 0
      %p169 = por %p167, %p168
      %p170 = scmp.ne.s32.totalorder %s159, %s162
      %p171 = scmp.eq.s32.totalorder %s21, 1
      %p172 = por %p170, %p171
      %p173 = scmp.ne.s32.totalorder %s162, %s163
      %p174 = scmp.eq.s32.totalorder %s21, 0
      %p175 = por %p173, %p174
      %p176 = scmp.ne.s32.totalorder %s162, %s163
      %p177 = scmp.eq.s32.totalorder %s22, 1
      %p178 = por %p176, %p177
      %p180 = scmp.ne.s32.totalorder %s163, %s179
      %p181 = scmp.eq.s32.totalorder %s22, 0
      %p182 = por %p180, %p181
      %s183 = ssub.s32 %s23, %s35
      %s184 = ssub.s32 %s24, %s31
      %s185 = sor.u32 %s183, %s184
      %p186 = scmp.eq.s32.totalorder %s185, 0
      %s188 = sadd.s32 %s187, 1
      %s189 = scalar_select %p186, %s187, %s188
      %p192 = pneg %p186
      %p193 = scmp.eq.s32.totalorder %s16, 1
      %p194 = por %p192, %p193
      %p195 = scmp.ne.s32.totalorder %s187, %s190
      %p196 = scmp.eq.s32.totalorder %s16, 0
      %p197 = por %p195, %p196
      %p198 = scmp.ne.s32.totalorder %s187, %s190
      %p199 = scmp.eq.s32.totalorder %s21, 1
      %p200 = por %p198, %p199
      %p201 = scmp.ne.s32.totalorder %s190, %s191
      %p202 = scmp.eq.s32.totalorder %s21, 0
      %p203 = por %p201, %p202
      %p204 = scmp.ne.s32.totalorder %s190, %s191
      %p205 = scmp.eq.s32.totalorder %s22, 1
      %p206 = por %p204, %p205
      %p208 = scmp.ne.s32.totalorder %s191, %s207
      %p209 = scmp.eq.s32.totalorder %s22, 0
      %p210 = por %p208, %p209
      %p211 = scmp.le.s32.totalorder 1, %s16
      %p212 = scmp.lt.s32.totalorder %s16, 3
      %p213 = pnand %p211, %p212
      %p214 = pneg %p213
      // Predicated region
      $region9: #{tpu_custom_call.1} parent=5 // pred_check
        _
      $region10: #{tpu_custom_call.1} parent=5 // pred_check_branch
        %216 = sbr.rel (%p213) target = $region12
      $region11: #{tpu_custom_call.1} parent=5 // pred_region
        %s217 = ssub.s32 %s16, 1
        // Predicated region
        $region13: #{tpu_custom_call.1} parent=11 // pred_check
          %p218 = pneg %p77
        $region14: #{tpu_custom_call.1} parent=11 // pred_check_branch
          %220 = sbr.rel (%p218) target = $region16
        $region15: #{tpu_custom_call.1} parent=11 // pred_region
          _
        $region16: #{tpu_custom_call.1} parent=11 // pred_fallthru
          _
        // Predicated region
        $region17: #{tpu_custom_call.1} parent=11 // pred_check
          %p221 = pneg %p98
        $region18: #{tpu_custom_call.1} parent=11 // pred_check_branch
          %223 = sbr.rel (%p221) target = $region20
        $region19: #{tpu_custom_call.1} parent=11 // pred_region
          _
        $region20: #{tpu_custom_call.1} parent=11 // pred_fallthru
          _
        // Predicated region
        $region21: #{tpu_custom_call.1} parent=11 // pred_check
          %p224 = pneg %p119
        $region22: #{tpu_custom_call.1} parent=11 // pred_check_branch
          %226 = sbr.rel (%p224) target = $region24
        $region23: #{tpu_custom_call.1} parent=11 // pred_region
          _
        $region24: #{tpu_custom_call.1} parent=11 // pred_fallthru
          _
      $region12: #{tpu_custom_call.1} parent=5 // pred_fallthru
        _
      %p227 = scmp.lt.s32.totalorder %s16, 2
      // Predicated region
      $region25: #{tpu_custom_call.1} parent=5 // pred_check
        %p228 = pneg %p227
      $region26: #{tpu_custom_call.1} parent=5 // pred_check_branch
        %230 = sbr.rel (%p228) target = $region28
      $region27: #{tpu_custom_call.1} parent=5 // pred_region
        // Predicated region
        $region29: #{tpu_custom_call.1} parent=27 // pred_check
          %p231 = pneg %p50
        $region30: #{tpu_custom_call.1} parent=27 // pred_check_branch
          %233 = sbr.rel (%p231) target = $region32
        $region31: #{tpu_custom_call.1} parent=27 // pred_region
          %s234 = smul.u32 2, %s24
          %p235 = scmp.lt.s32.totalorder %s23, 1
          %s236 = scalar_select %p235, %s23, 1
          %p237 = scmp.lt.s32.totalorder %s234, 1
          %s238 = scalar_select %p237, %s234, 1
          %s239 = smul.addr %s236, 2
          %s240 = sadd.s32 %s238, %s239
          %s241 = smul.addr %s240, 4
          %s242 = scalar_lea.vmem %s0, %s241
          %s243 = smul.u32 2, %s24
        $region32: #{tpu_custom_call.1} parent=27 // pred_fallthru
          _
      $region28: #{tpu_custom_call.1} parent=5 // pred_fallthru
        _
      %p244 = scmp.le.s32.totalorder 1, %s16
      %p245 = scmp.lt.s32.totalorder %s16, 3
      %p246 = pnand %p244, %p245
      %p247 = pneg %p246
      // Predicated region
      $region33: #{tpu_custom_call.1} parent=5 // pred_check
        _
      $region34: #{tpu_custom_call.1} parent=5 // pred_check_branch
        %249 = sbr.rel (%p246) target = $region36
      $region35: #{tpu_custom_call.1} parent=5 // pred_region
        %s250 = ssub.s32 %s16, 1
        %s251 = smul.u32 2, %s26
        %p252 = scmp.lt.s32.totalorder %s25, 1
        %s253 = scalar_select %p252, %s25, 1
        %p254 = scmp.lt.s32.totalorder %s251, 1
        %s255 = scalar_select %p254, %s251, 1
        %s256 = smul.addr %s253, 2
        %s257 = sadd.s32 %s255, %s256
        %s258 = smul.addr %s257, 4
        %s259 = scalar_lea.vmem %s0, %s258
        %p260 = pneg %p56
        %p261 = pneg %p53
        %p262 = pneg %p77
        %p263 = pneg %p74
        %p264 = pneg %p98
        %p265 = pneg %p95
        %p266 = pneg %p119
        %p267 = pneg %p116
        %p268 = pneg %p147
        %p269 = pneg %p144
        %s270 = sand.u32 %s134, 1
        %s271 = scalar_lea.sflag [#allocation3], %s270
        %s272 = sand.u32 %s134, 1
        %s273 = smul.addr %s272, 16
        %s274 = scalar_lea.vmem [#allocation2], %s273
        %p275 = pneg %p175
        %p276 = pneg %p172
        %p277 = scmp.lt.s32.totalorder %s25, 1
        %s278 = scalar_select %p277, %s25, 1
        %p279 = scmp.lt.s32.totalorder %s26, 0
        %s280 = scalar_select %p279, %s26, 0
        %s281 = sadd.s32 %s280, %s278
        %s282 = smul.addr %s281, 8
        %s283 = scalar_lea.vmem %s5, %s282
        %p284 = pneg %p203
        %p285 = pneg %p200
        %p286 = scmp.lt.s32.totalorder %s25, 1
        %s287 = scalar_select %p286, %s25, 1
        %p288 = scmp.lt.s32.totalorder %s26, 0
        %s289 = scalar_select %p288, %s26, 0
        %s290 = sadd.s32 %s289, %s287
        %s291 = smul.addr %s290, 8
        %s292 = scalar_lea.vmem %s6, %s291
        %s293 = smul.u32 2, %s26
        %p294 = scmp.lt.s32.totalorder %s25, 1
        %s295 = scalar_select %p294, %s25, 1
        %p296 = scmp.lt.s32.totalorder %s293, 1
        %s297 = scalar_select %p296, %s293, 1
        %s298 = smul.addr %s295, 2
        %s299 = sadd.s32 %s297, %s298
        %s300 = smul.addr %s299, 4
        %s301 = scalar_lea.vmem %s0, %s300
        %s302 = smul.u32 2, %s26
        %s303 = smul.u32 2, %s26
        %p304 = scmp.lt.s32.totalorder %s25, 1
        %s305 = scalar_select %p304, %s25, 1
        %p306 = scmp.lt.s32.totalorder %s26, 0
        %s307 = scalar_select %p306, %s26, 0
        %s308 = sadd.s32 %s307, %s305
        %s309 = smul.addr %s308, 8
        %s310 = scalar_lea.vmem %s5, %s309
        %p311 = scmp.lt.s32.totalorder %s25, 1
        %s312 = scalar_select %p311, %s25, 1
        %p313 = scmp.lt.s32.totalorder %s26, 0
        %s314 = scalar_select %p313, %s26, 0
        %s315 = sadd.s32 %s314, %s312
        %s316 = smul.addr %s315, 8
        %s317 = scalar_lea.vmem %s6, %s316
        %v318 = vld [vmem:[%s301] sm:$0xff]
        %v319 = vld [vmem:[%s1] sm:$0xf]
        %321 = vset.pattern.permute.xlu0 0
        %322 = vperm.xlu0 %321, %v319
        %v323 = vpop.permute.xlu0 %322
        %v325 = vunpack.c.l.s4 839922192
        %v326 = vunpack.c.0.s8 %v325
        %v327 = vperm.slane %v323, %v326
        %v329 = vmul.f32 %v318, %v327
        %v330 = vld [vmem:[%s2] sm:$0xf]
        %332 = vset.pattern.permute.xlu0 0
        %333 = vperm.xlu0 %332, %v330
        %v334 = vpop.permute.xlu0 %333
        %v336 = vunpack.c.l.s4 839922192
        %v337 = vunpack.c.0.s8 %v336
        %v338 = vperm.slane %v334, %v337
        %v340 = vadd.f32 %v329, %v338
        %v341 = vmax.f32 %v340, 0.0
        %v342 = vld [vmem:[%s3] sm:$0xff]
        %344 = vst [vmem:[#allocation1] ss:$2 sm:$0xff] %v341
        %v345 = vld.sshfl [vmem:[#allocation1] sm:$0xff pattern:$0x75316420]
        %v346 = vld.sshfl [vmem:[#allocation1 + $0x8] sm:$0xff pattern:$0x75316420]
        %vm347 = vcmask 31744
        %v349 = vsel %vm347, %v342, 0
        %vm351 = vcmask 1043456
        %v352 = vsel %vm351, %v345, 0
        %v354 = vsel %vm351, %v346, 0
        %356 = vmatpush.msra.mxu0 0.0
        %357 = vmatpush.msra.mxu0 0.0
        %358 = vmatpush.msra.mxu0 0.0
        %359 = vmatpush.msra.mxu0 0.0
        %360 = vmatpush.msra.mxu0 0.0
        %361 = vmatpush.msra.mxu0 0.0
        %362 = vmatpush.msra.mxu0 0.0
        %363 = vmatpush.msra.mxu0 0.0
        %364 = vmatpush.msra.mxu0 0.0
        %365 = vmatpush.msra.mxu0 0.0
        %366 = vmatpush.msra.mxu0 0.0
        %367 = vmatpush.msra.mxu0 0.0
        %368 = vmatpush.msra.mxu0 0.0
        %369 = vmatpush.msra.mxu0 0.0
        %370 = vmatpush.msra.mxu0 0.0
        %371 = vmatpush.msra.mxu0 %v352
        %372 = vmatmul.f32.gmra.mxu0 %v349
        %v373 = vpop.f32.mrf.mxu0
        %v374 = vadd.f32 0.0, %v373
        %375 = vdwg.mxu0
        %376 = vmatpush.msra.mxu0 0.0
        %377 = vmatpush.msra.mxu0 0.0
        %378 = vmatpush.msra.mxu0 0.0
        %379 = vmatpush.msra.mxu0 0.0
        %380 = vmatpush.msra.mxu0 0.0
        %381 = vmatpush.msra.mxu0 0.0
        %382 = vmatpush.msra.mxu0 0.0
        %383 = vmatpush.msra.mxu0 0.0
        %384 = vmatpush.msra.mxu0 0.0
        %385 = vmatpush.msra.mxu0 0.0
        %386 = vmatpush.msra.mxu0 0.0
        %387 = vmatpush.msra.mxu0 0.0
        %388 = vmatpush.msra.mxu0 0.0
        %389 = vmatpush.msra.mxu0 0.0
        %390 = vmatpush.msra.mxu0 0.0
        %391 = vmatpush.msra.mxu0 %v354
        %392 = vmatmul.f32.gmra.mxu0 %v349
        %v393 = vpop.f32.mrf.mxu0
        %v394 = vadd.f32 0.0, %v393
        %395 = vdwg.mxu0
        %396 = vst [vmem:[%s274] sm:$0xff] %v374
        %397 = vst [vmem:[%s274 + $0x8] sm:$0xff] %v394
        %v398 = vadd.f32 %v374, %v394
        %399 = vadd.xlane.f32.xlu0 %v398
        %v400 = vpop.xlane.xlu0 %399
        %vm401 = vcmask 7168
        %402 = vst.msk [vmem:[%s310] sm:$0xff] %vm401, %v400
        %v403 = vmul.f32 %v374, %v374
        %v404 = vmul.f32 %v394, %v394
        %v405 = vadd.f32 %v403, %v404
        %406 = vadd.xlane.f32.xlu0 %v405
        %v407 = vpop.xlane.xlu0 %406
        %408 = vst.msk [vmem:[%s317] sm:$0xff] %vm401, %v407
        %s409 = sand.u32 %s134, 1
        %s410 = scalar_lea.sflag [#allocation3], %s409
        %s411 = sand.u32 %s134, 1
        %s412 = smul.addr %s411, 16
        %s413 = scalar_lea.vmem [#allocation2], %s412
        %p414 = scmp.lt.s32.totalorder %s25, 1
        %s415 = scalar_select %p414, %s25, 1
        %p416 = scmp.lt.s32.totalorder %s26, 0
        %s417 = scalar_select %p416, %s26, 0
        %s418 = sadd.s32 %s417, %s415
        %s419 = smul.addr %s418, 8
        %s420 = scalar_lea.vmem %s5, %s419
        %p421 = scmp.lt.s32.totalorder %s25, 1
        %s422 = scalar_select %p421, %s25, 1
        %p423 = scmp.lt.s32.totalorder %s26, 0
        %s424 = scalar_select %p423, %s26, 0
        %s425 = sadd.s32 %s424, %s422
        %s426 = smul.addr %s425, 8
        %s427 = scalar_lea.vmem %s6, %s426
        // Predicated region
        $region37: #{tpu_custom_call.1} parent=35 // pred_check
          %p428 = pneg %p144
        $region38: #{tpu_custom_call.1} parent=35 // pred_check_branch
          %430 = sbr.rel (%p428) target = $region40
        $region39: #{tpu_custom_call.1} parent=35 // pred_region
          %s431 = smul.u32 2, %s26
          %433 = vsyncadd %s410, 0
          %s434 = smul.addr %s25, 2
          %s435 = sadd.s32 %s431, %s434
          %s436 = smul.addr %s435, 8
          %s437 = scalar_lea.hbm %s4, %s436
          %s439 = sshll.u32 %s413, 4
          %s440 = int_to_ptr.vmem [resolvable:$true] %s439
          %s441 = sshll.u32 %s437, 4
          %s442 = int_to_ptr.hbm [resolvable:$true] %s441
          %444 = dma.vmem_to_hbm [thread:$0]  %s440, 256, %s442, %s410
        $region40: #{tpu_custom_call.1} parent=35 // pred_fallthru
          _
        // Predicated region
        $region41: #{tpu_custom_call.1} parent=35 // pred_check
          %p445 = pneg %p172
        $region42: #{tpu_custom_call.1} parent=35 // pred_check_branch
          %447 = sbr.rel (%p445) target = $region44
        $region43: #{tpu_custom_call.1} parent=35 // pred_region
          _
        $region44: #{tpu_custom_call.1} parent=35 // pred_fallthru
          _
        // Predicated region
        $region45: #{tpu_custom_call.1} parent=35 // pred_check
          %p448 = pneg %p200
        $region46: #{tpu_custom_call.1} parent=35 // pred_check_branch
          %450 = sbr.rel (%p448) target = $region48
        $region47: #{tpu_custom_call.1} parent=35 // pred_region
          _
        $region48: #{tpu_custom_call.1} parent=35 // pred_fallthru
          _
      $region36: #{tpu_custom_call.1} parent=5 // pred_fallthru
        _
      %p451 = scmp.le.s32.totalorder 2, %s16
      // Predicated region
      $region49: #{tpu_custom_call.1} parent=5 // pred_check
        %p452 = pneg %p451
      $region50: #{tpu_custom_call.1} parent=5 // pred_check_branch
        %454 = sbr.rel (%p452) target = $region52
      $region51: #{tpu_custom_call.1} parent=5 // pred_region
        %s455 = ssub.s32 %s16, 2
        // Predicated region
        $region53: #{tpu_custom_call.1} parent=51 // pred_check
          %p456 = pneg %p150
        $region54: #{tpu_custom_call.1} parent=51 // pred_check_branch
          %458 = sbr.rel (%p456) target = $region56
        $region55: #{tpu_custom_call.1} parent=51 // pred_region
          %s459 = sand.u32 %s135, 1
          %s460 = scalar_lea.sflag [#allocation3], %s459
          %s461 = sand.u32 %s135, 1
          %s462 = smul.addr %s461, 16
          %s463 = scalar_lea.vmem [#allocation2], %s462
          %465 = dma.done %s460, 256
        $region56: #{tpu_custom_call.1} parent=51 // pred_fallthru
          _
        // Predicated region
        $region57: #{tpu_custom_call.1} parent=51 // pred_check
          %p466 = pneg %p178
        $region58: #{tpu_custom_call.1} parent=51 // pred_check_branch
          %468 = sbr.rel (%p466) target = $region60
        $region59: #{tpu_custom_call.1} parent=51 // pred_region
          %p469 = scmp.lt.s32.totalorder %s27, 1
          %s470 = scalar_select %p469, %s27, 1
          %p471 = scmp.lt.s32.totalorder %s28, 0
          %s472 = scalar_select %p471, %s28, 0
          %s473 = sadd.s32 %s472, %s470
          %s474 = smul.addr %s473, 8
          %s475 = scalar_lea.vmem %s5, %s474
        $region60: #{tpu_custom_call.1} parent=51 // pred_fallthru
          _
        // Predicated region
        $region61: #{tpu_custom_call.1} parent=51 // pred_check
          %p476 = pneg %p206
        $region62: #{tpu_custom_call.1} parent=51 // pred_check_branch
          %478 = sbr.rel (%p476) target = $region64
        $region63: #{tpu_custom_call.1} parent=51 // pred_region
          %p479 = scmp.lt.s32.totalorder %s27, 1
          %s480 = scalar_select %p479, %s27, 1
          %p481 = scmp.lt.s32.totalorder %s28, 0
          %s482 = scalar_select %p481, %s28, 0
          %s483 = sadd.s32 %s482, %s480
          %s484 = smul.addr %s483, 8
          %s485 = scalar_lea.vmem %s6, %s484
        $region64: #{tpu_custom_call.1} parent=51 // pred_fallthru
          _
      $region52: #{tpu_custom_call.1} parent=5 // pred_fallthru
        _
    $region6: #{tpu_custom_call.1} parent=1 // loop_footer
      %s20 = sadd.s32 1, %s16
    $region7: #{tpu_custom_call.1} parent=1 // loop_footer_branch
      %15 = sbr.rel target = $region3
    $region8: #{tpu_custom_call.1} parent=1 // loop_exit
      _
    %486 = vsyncpa [#allocation3], 1
    %s487 = scalar_lea.sflag [#allocation3], 1
    %488 = vsyncpa %s487, 1

</llo_original>
